<compile_context>
chip_gen: v5e
topology: v5e:2x2
jax: 0.10.0
libtpu: 0.0.40
codegen_flags: <defaults>
</compile_context>

<pallas_src>
import jax
import jax.numpy as jnp
from jax.experimental import pallas as pl
from jax.experimental.pallas import tpu as pltpu


def mlp_kernel(params_ref, x_ref, o_ref):
    # params_ref: SMEM f32[17] = [w1(2*4 row-major), b1(4), w2(4), b2(1)]
    # x_ref:      VMEM f32[2, tile_rows, 128]  (feature index leading,
    #                                           batch packed dense as rows x 128)
    # o_ref:      VMEM f32[tile_rows, 128]     (sublane+lane dense output)
    x0 = x_ref[0]                               # (tile_rows, 128)
    x1 = x_ref[1]                               # (tile_rows, 128)

    # Accumulate fc2 output, starting from its bias (scalar broadcast).
    o = jnp.full_like(x0, params_ref[16])
    for j in range(4):                          # statically unrolled: 4 hidden units
        w1_0j = params_ref[j]                   # w1[0, j]
        w1_1j = params_ref[4 + j]               # w1[1, j]
        b1_j = params_ref[8 + j]                # b1[j]
        w2_j = params_ref[12 + j]               # w2[j, 0]
        h = x0 * w1_0j + x1 * w1_1j + b1_j      # fc1 row j (VPU FMAs)
        h = jnp.maximum(h, 0.0)                 # ReLU
        o = o + h * w2_j                        # fc2 accumulation

    o_ref[...] = o.astype(o_ref.dtype)


def simple_nn_forward(x, w1, b1, w2, b2, *, tile_rows=2048):
    """x: (B, 2) f32. w1: (2, 4), b1: (4,), w2: (4, 1), b2: (1,).

    tile_rows: sublane rows (of 128 lanes) per grid step; must be a multiple
    of 8. 2048 rows = 256K batch elements = ~2 MiB x-payload per step (safe on
    v5e's 16 MiB default scoped VMEM; raise to 4096-8192 on v6e/v7x).
    """
    B = x.shape[0]
    # Flatten all 17 parameters into one SMEM-resident f32 vector.
    params = jnp.concatenate([
        w1.reshape(-1),   # 8  : w1[i, j] at index i*4 + j
        b1.reshape(-1),   # 4
        w2.reshape(-1),   # 4
        b2.reshape(-1),   # 1
    ]).astype(jnp.float32)

    # Pack batch densely into (rows, 128) f32 tiles (full (8,128) vregs).
    rows = pl.cdiv(B, 128)
    if rows <= tile_rows:
        # Small batch: one block covering the whole (padded) array — no
        # oversized-tile padding, block_shape == array shape so no (8,128)
        # divisibility requirement.
        tile_rows_eff = rows
        rows_pad = rows
    else:
        tile_rows_eff = tile_rows           # multiple of 8
        rows_pad = pl.cdiv(rows, tile_rows_eff) * tile_rows_eff
    b_pad = rows_pad * 128

    xt = jnp.transpose(x)                                   # (2, B)
    xt = jnp.pad(xt, ((0, 0), (0, b_pad - B)))              # (2, B_pad)
    xt = xt.reshape(2, rows_pad, 128)                       # (2, rows_pad, 128)

    grid = (rows_pad // tile_rows_eff,)
    out = pl.pallas_call(
        mlp_kernel,
        out_shape=jax.ShapeDtypeStruct((rows_pad, 128), x.dtype),
        grid=grid,
        in_specs=[
            # 17 scalars: whole array in SMEM, resident across all grid steps.
            pl.BlockSpec(memory_space=pltpu.SMEM),
            # x tile: both feature rows, tile_rows x 128 dense batch block.
            pl.BlockSpec((2, tile_rows_eff, 128), lambda i: (0, i, 0)),
        ],
        # Sublane+lane dense output tile.
        out_specs=pl.BlockSpec((tile_rows_eff, 128), lambda i: (i, 0)),
        compiler_params=pltpu.CompilerParams(
            dimension_semantics=("parallel",),
        ),
        cost_estimate=pl.CostEstimate(
            flops=29 * b_pad,                     # ~29 VPU flops per batch element
            transcendentals=0,
            bytes_accessed=12 * b_pad + 17 * 4,   # 8 B in + 4 B out per element + params
        ),
    )(params, xt)

    return out.reshape(-1)[:B].reshape(B, 1)


def init_params(key):
    # Deterministic init mimicking PyTorch Linear init:
    # uniform in [-1/sqrt(fan_in), 1/sqrt(fan_in)].
    k1, k2, k3, k4 = jax.random.split(key, 4)
    in1, hid, out = 2, 4, 1
    lim1 = 1.0 / jnp.sqrt(in1)
    lim2 = 1.0 / jnp.sqrt(hid)
    # Weights stored as (in_features, out_features) == PyTorch W.T
    w1 = jax.random.uniform(k1, (in1, hid), jnp.float32, -lim1, lim1)
    b1 = jax.random.uniform(k2, (hid,), jnp.float32, -lim1, lim1)
    w2 = jax.random.uniform(k3, (hid, out), jnp.float32, -lim2, lim2)
    b2 = jax.random.uniform(k4, (out,), jnp.float32, -lim2, lim2)
    return w1, b1, w2, b2


if __name__ == "__main__":
    key = jax.random.PRNGKey(0)
    kx, kx2, kp = jax.random.split(key, 3)
    w1, b1, w2, b2 = init_params(kp)

    ok = True
    # Small batch consistent with the module's (B, 2) input.
    for kxi, B in ((kx, 8), (kx2, 333)):
        x = jax.random.normal(kxi, (B, 2), jnp.float32)
        out = simple_nn_forward(x, w1, b1, w2, b2)
        out = jax.block_until_ready(out)
        # Reference check in plain JAX (same math as the PyTorch forward).
        ref = jnp.maximum(x @ w1 + b1[None, :], 0.0) @ w2 + b2[None, :]
        ok = ok and (out.shape == (B, 1)) and bool(
            jnp.allclose(out, ref, atol=1e-5, rtol=1e-5))

    assert ok
    print("KERNEL_OK")
</pallas_src>

<mosaic_0001>
module attributes {stable_mosaic.version = 11 : i64} {
  func.func @mlp_kernel(%arg0: i32, %arg1: memref<17xf32, #tpu.memory_space<smem>>, %arg2: memref<2x1x128xf32, #tpu.memory_space<vmem>>, %arg3: memref<1x128xf32, #tpu.memory_space<vmem>>) attributes {dimension_semantics = [#tpu.dimension_semantics<parallel>], iteration_bounds = array<i64: 1>, scalar_prefetch = 0 : i64, scratch_operands = 0 : i64, tpu.core_type = #tpu.core_type<tc>, window_params = [{transform_indices = @transform_0, window_bounds = array<i64: 17>}, {transform_indices = @transform_1, window_bounds = array<i64: 2, 1, 128>}, {transform_indices = @transform_2, window_bounds = array<i64: 1, 128>}]} {
    %c0 = arith.constant 0 : index
    %c0_0 = arith.constant 0 : index
    %c0_1 = arith.constant 0 : index
    %0 = vector.load %arg2[%c0, %c0_0, %c0_1] : memref<2x1x128xf32, #tpu.memory_space<vmem>>, vector<1x1x128xf32>
    %1 = vector.shape_cast %0 : vector<1x1x128xf32> to vector<1x128xf32>
    %c1 = arith.constant 1 : index
    %c0_2 = arith.constant 0 : index
    %c0_3 = arith.constant 0 : index
    %2 = vector.load %arg2[%c1, %c0_2, %c0_3] : memref<2x1x128xf32, #tpu.memory_space<vmem>>, vector<1x1x128xf32>
    %3 = vector.shape_cast %2 : vector<1x1x128xf32> to vector<1x128xf32>
    %c16 = arith.constant 16 : index
    %4 = memref.load %arg1[%c16] : memref<17xf32, #tpu.memory_space<smem>>
    %5 = vector.broadcast %4 : f32 to vector<1x128xf32>
    %c0_4 = arith.constant 0 : index
    %6 = memref.load %arg1[%c0_4] : memref<17xf32, #tpu.memory_space<smem>>
    %c4 = arith.constant 4 : index
    %7 = memref.load %arg1[%c4] : memref<17xf32, #tpu.memory_space<smem>>
    %c8 = arith.constant 8 : index
    %8 = memref.load %arg1[%c8] : memref<17xf32, #tpu.memory_space<smem>>
    %c12 = arith.constant 12 : index
    %9 = memref.load %arg1[%c12] : memref<17xf32, #tpu.memory_space<smem>>
    %10 = vector.broadcast %6 : f32 to vector<1x128xf32>
    %11 = arith.mulf %1, %10 : vector<1x128xf32>
    %12 = vector.broadcast %7 : f32 to vector<1x128xf32>
    %13 = arith.mulf %3, %12 : vector<1x128xf32>
    %14 = arith.addf %11, %13 : vector<1x128xf32>
    %15 = vector.broadcast %8 : f32 to vector<1x128xf32>
    %16 = arith.addf %14, %15 : vector<1x128xf32>
    %cst = arith.constant 0.000000e+00 : f32
    %17 = vector.broadcast %cst : f32 to vector<1x128xf32>
    %18 = arith.maximumf %16, %17 : vector<1x128xf32>
    %19 = vector.broadcast %9 : f32 to vector<1x128xf32>
    %20 = arith.mulf %18, %19 : vector<1x128xf32>
    %21 = arith.addf %5, %20 : vector<1x128xf32>
    %c1_5 = arith.constant 1 : index
    %22 = memref.load %arg1[%c1_5] : memref<17xf32, #tpu.memory_space<smem>>
    %c5 = arith.constant 5 : index
    %23 = memref.load %arg1[%c5] : memref<17xf32, #tpu.memory_space<smem>>
    %c9 = arith.constant 9 : index
    %24 = memref.load %arg1[%c9] : memref<17xf32, #tpu.memory_space<smem>>
    %c13 = arith.constant 13 : index
    %25 = memref.load %arg1[%c13] : memref<17xf32, #tpu.memory_space<smem>>
    %26 = vector.broadcast %22 : f32 to vector<1x128xf32>
    %27 = arith.mulf %1, %26 : vector<1x128xf32>
    %28 = vector.broadcast %23 : f32 to vector<1x128xf32>
    %29 = arith.mulf %3, %28 : vector<1x128xf32>
    %30 = arith.addf %27, %29 : vector<1x128xf32>
    %31 = vector.broadcast %24 : f32 to vector<1x128xf32>
    %32 = arith.addf %30, %31 : vector<1x128xf32>
    %cst_6 = arith.constant 0.000000e+00 : f32
    %33 = vector.broadcast %cst_6 : f32 to vector<1x128xf32>
    %34 = arith.maximumf %32, %33 : vector<1x128xf32>
    %35 = vector.broadcast %25 : f32 to vector<1x128xf32>
    %36 = arith.mulf %34, %35 : vector<1x128xf32>
    %37 = arith.addf %21, %36 : vector<1x128xf32>
    %c2 = arith.constant 2 : index
    %38 = memref.load %arg1[%c2] : memref<17xf32, #tpu.memory_space<smem>>
    %c6 = arith.constant 6 : index
    %39 = memref.load %arg1[%c6] : memref<17xf32, #tpu.memory_space<smem>>
    %c10 = arith.constant 10 : index
    %40 = memref.load %arg1[%c10] : memref<17xf32, #tpu.memory_space<smem>>
    %c14 = arith.constant 14 : index
    %41 = memref.load %arg1[%c14] : memref<17xf32, #tpu.memory_space<smem>>
    %42 = vector.broadcast %38 : f32 to vector<1x128xf32>
    %43 = arith.mulf %1, %42 : vector<1x128xf32>
    %44 = vector.broadcast %39 : f32 to vector<1x128xf32>
    %45 = arith.mulf %3, %44 : vector<1x128xf32>
    %46 = arith.addf %43, %45 : vector<1x128xf32>
    %47 = vector.broadcast %40 : f32 to vector<1x128xf32>
    %48 = arith.addf %46, %47 : vector<1x128xf32>
    %cst_7 = arith.constant 0.000000e+00 : f32
    %49 = vector.broadcast %cst_7 : f32 to vector<1x128xf32>
    %50 = arith.maximumf %48, %49 : vector<1x128xf32>
    %51 = vector.broadcast %41 : f32 to vector<1x128xf32>
    %52 = arith.mulf %50, %51 : vector<1x128xf32>
    %53 = arith.addf %37, %52 : vector<1x128xf32>
    %c3 = arith.constant 3 : index
    %54 = memref.load %arg1[%c3] : memref<17xf32, #tpu.memory_space<smem>>
    %c7 = arith.constant 7 : index
    %55 = memref.load %arg1[%c7] : memref<17xf32, #tpu.memory_space<smem>>
    %c11 = arith.constant 11 : index
    %56 = memref.load %arg1[%c11] : memref<17xf32, #tpu.memory_space<smem>>
    %c15 = arith.constant 15 : index
    %57 = memref.load %arg1[%c15] : memref<17xf32, #tpu.memory_space<smem>>
    %58 = vector.broadcast %54 : f32 to vector<1x128xf32>
    %59 = arith.mulf %1, %58 : vector<1x128xf32>
    %60 = vector.broadcast %55 : f32 to vector<1x128xf32>
    %61 = arith.mulf %3, %60 : vector<1x128xf32>
    %62 = arith.addf %59, %61 : vector<1x128xf32>
    %63 = vector.broadcast %56 : f32 to vector<1x128xf32>
    %64 = arith.addf %62, %63 : vector<1x128xf32>
    %cst_8 = arith.constant 0.000000e+00 : f32
    %65 = vector.broadcast %cst_8 : f32 to vector<1x128xf32>
    %66 = arith.maximumf %64, %65 : vector<1x128xf32>
    %67 = vector.broadcast %57 : f32 to vector<1x128xf32>
    %68 = arith.mulf %66, %67 : vector<1x128xf32>
    %69 = arith.addf %53, %68 : vector<1x128xf32>
    %c0_9 = arith.constant 0 : index
    %c0_10 = arith.constant 0 : index
    %70 = vector.load %arg3[%c0_9, %c0_10] : memref<1x128xf32, #tpu.memory_space<vmem>>, vector<1x128xf32>
    tpu.vector_store %arg3[%c0_9, %c0_10], %69 {strides = array<i32>} : memref<1x128xf32, #tpu.memory_space<vmem>>, vector<1x128xf32>,
    return
  }
  func.func @transform_0(%arg0: i32) -> i32 {
    %c0_i32 = arith.constant 0 : i32
    %c0_i32_0 = arith.constant 0 : i32
    return %c0_i32 : i32
  }
  func.func @transform_1(%arg0: i32) -> (i32, i32, i32) {
    %c0_i32 = arith.constant 0 : i32
    %c0_i32_0 = arith.constant 0 : i32
    %c0_i32_1 = arith.constant 0 : i32
    return %c0_i32, %arg0, %c0_i32_0 : i32, i32, i32
  }
  func.func @transform_2(%arg0: i32) -> (i32, i32) {
    %c0_i32 = arith.constant 0 : i32
    %c0_i32_0 = arith.constant 0 : i32
    return %arg0, %c0_i32 : i32, i32
  }
}

</mosaic_0001>

<llo_original>
// kernel: tpu_custom_call.1
$region0: #{tpu_custom_call.1}
  #allocation0 [shape = 'u32[]', space=smem, size = 0x4, offset = 0x4, fixed_abs, tag = 'smem constant byte address 0x4 - core index']
  #allocation1 [shape = 'u32[72,128]{1,0:T(1,128)}', space=vmem, size = 0x9000, scoped, tag = 'internal scratch']
  %s0 = inlined_call_operand.hbm [shape: f32[17], index: 0, kind: input, shape index: {}]
  %s1 = inlined_call_operand.hbm [shape: f32[2,1,128], index: 1, kind: input, shape index: {}]
  %s2 = inlined_call_operand.hbm [shape: f32[1,128], index: 2, kind: output, shape index: {}]
  %s3 = sld [smem:[#allocation0]]
  $region26: #{tpu_custom_call.1} parent=0
    _
  %s5 = ssub.s32 1, %s3
  %s6 = scalar_select 0, %s5, %s3
  $region1: #{tpu_custom_call.1} parent=0
    #allocation2 [shape = 'u8[512]{0}', space=smem, size = 0x200, scoped, tag = 'input window, operand 0, single buffered']
    #allocation3 [shape = 's32[1]{0}', space=sflag, size = 0x4, scoped, tag = 'scoped memory for tpu_custom_call.1']
    #allocation4 [shape = 's32[1]{0}', space=sflag, size = 0x4, scoped, tag = 'scoped memory for tpu_custom_call.1']
    #allocation5 [shape = 's32[1]{0}', space=sflag, size = 0x4, scoped, tag = 'scoped memory for tpu_custom_call.1']
    #allocation6 [shape = 'u8[1024]{0}', space=vmem, size = 0x400, scoped, tag = 'input window, operand 1, single buffered']
    #allocation7 [shape = 'u8[512]{0}', space=vmem, size = 0x400, scoped, tag = 'output window, operand 0, single buffered']
    %7 = vsyncpa [#allocation5], 0
    %8 = vsyncpa [#allocation3], 0
    %9 = vsyncpa [#allocation4], 0
    // Predicated region
    $region2: #{tpu_custom_call.1} parent=1 // pred_check
      _
    $region3: #{tpu_custom_call.1} parent=1 // pred_check_branch
      %11 = sbr.rel (0) target = $region5
    $region4: #{tpu_custom_call.1} parent=1 // pred_region
      %13 = vsyncadd [#allocation5], 0
      %s15 = sshll.u32 %s0, 4
      %s16 = int_to_ptr.hbm [resolvable:$true] %s15
      %18 = dma.hbm_to_smem %s16, 16, [#allocation2], [#allocation5]
    $region5: #{tpu_custom_call.1} parent=1 // pred_fallthru
      _
    // Predicated region
    $region6: #{tpu_custom_call.1} parent=1 // pred_check
      _
    $region7: #{tpu_custom_call.1} parent=1 // pred_check_branch
      %20 = sbr.rel (0) target = $region9
    $region8: #{tpu_custom_call.1} parent=1 // pred_region
      %22 = vsyncadd [#allocation3], 0
      %s23 = sshll.u32 %s1, 4
      %s24 = int_to_ptr.hbm [resolvable:$true] %s23
      %s25 = sshll.u32 [#allocation6], 4
      %s26 = int_to_ptr.vmem [resolvable:$true] %s25
      %31 = dma.hbm_to_vmem [thread:$0]  %s24, 32, %s26, [#allocation3], 16, 16, 1
    $region9: #{tpu_custom_call.1} parent=1 // pred_fallthru
      _
    // Predicated region
    $region10: #{tpu_custom_call.1} parent=1 // pred_check
      _
    $region11: #{tpu_custom_call.1} parent=1 // pred_check_branch
      %33 = sbr.rel (0) target = $region13
    $region12: #{tpu_custom_call.1} parent=1 // pred_region
      %35 = dma.done [#allocation5], 16
    $region13: #{tpu_custom_call.1} parent=1 // pred_fallthru
      _
    // Predicated region
    $region14: #{tpu_custom_call.1} parent=1 // pred_check
      _
    $region15: #{tpu_custom_call.1} parent=1 // pred_check_branch
      %37 = sbr.rel (0) target = $region17
    $region16: #{tpu_custom_call.1} parent=1 // pred_region
      %39 = dma.done [#allocation3], 32
    $region17: #{tpu_custom_call.1} parent=1 // pred_fallthru
      _
    %40 = sfence
    %v41 = vld [vmem:[#allocation6] sm:$0x1]
    %s42 = scalar_lea.vmem [#allocation6], 1
    %v43 = vld [vmem:[%s42] sm:$0x1]
    %s44 = sld [smem:[#allocation2 + $0x10]]
    %v45 = vstv %s44
    %s46 = sld [smem:[#allocation2]]
    %s47 = sld [smem:[#allocation2 + $0x4]]
    %s48 = sld [smem:[#allocation2 + $0x8]]
    %s49 = sld [smem:[#allocation2 + $0xc]]
    %v50 = vstv %s46
    %v51 = vmul.f32 %v41, %v50
    %v52 = vstv %s47
    %v53 = vmul.f32 %v43, %v52
    %v54 = vadd.f32 %v51, %v53
    %v55 = vstv %s48
    %v56 = vadd.f32 %v54, %v55
    %v57 = vmax.f32 %v56, 0.0
    %v58 = vstv %s49
    %v59 = vmul.f32 %v57, %v58
    %v60 = vadd.f32 %v45, %v59
    %s61 = sld [smem:[#allocation2 + $0x1]]
    %s62 = sld [smem:[#allocation2 + $0x5]]
    %s63 = sld [smem:[#allocation2 + $0x9]]
    %s64 = sld [smem:[#allocation2 + $0xd]]
    %v65 = vstv %s61
    %v66 = vmul.f32 %v41, %v65
    %v67 = vstv %s62
    %v68 = vmul.f32 %v43, %v67
    %v69 = vadd.f32 %v66, %v68
    %v70 = vstv %s63
    %v71 = vadd.f32 %v69, %v70
    %v72 = vmax.f32 %v71, 0.0
    %v73 = vstv %s64
    %v74 = vmul.f32 %v72, %v73
    %v75 = vadd.f32 %v60, %v74
    %s76 = sld [smem:[#allocation2 + $0x2]]
    %s77 = sld [smem:[#allocation2 + $0x6]]
    %s78 = sld [smem:[#allocation2 + $0xa]]
    %s79 = sld [smem:[#allocation2 + $0xe]]
    %v80 = vstv %s76
    %v81 = vmul.f32 %v41, %v80
    %v82 = vstv %s77
    %v83 = vmul.f32 %v43, %v82
    %v84 = vadd.f32 %v81, %v83
    %v85 = vstv %s78
    %v86 = vadd.f32 %v84, %v85
    %v87 = vmax.f32 %v86, 0.0
    %v88 = vstv %s79
    %v89 = vmul.f32 %v87, %v88
    %v90 = vadd.f32 %v75, %v89
    %s91 = sld [smem:[#allocation2 + $0x3]]
    %s92 = sld [smem:[#allocation2 + $0x7]]
    %s93 = sld [smem:[#allocation2 + $0xb]]
    %s94 = sld [smem:[#allocation2 + $0xf]]
    %v95 = vstv %s91
    %v96 = vmul.f32 %v41, %v95
    %v97 = vstv %s92
    %v98 = vmul.f32 %v43, %v97
    %v99 = vadd.f32 %v96, %v98
    %v100 = vstv %s93
    %v101 = vadd.f32 %v99, %v100
    %v102 = vmax.f32 %v101, 0.0
    %v103 = vstv %s94
    %v104 = vmul.f32 %v102, %v103
    %v105 = vadd.f32 %v90, %v104
    %106 = vst [vmem:[#allocation7] sm:$0x1] %v105
    // Predicated region
    $region18: #{tpu_custom_call.1} parent=1 // pred_check
      _
    $region19: #{tpu_custom_call.1} parent=1 // pred_check_branch
      %108 = sbr.rel (0) target = $region21
    $region20: #{tpu_custom_call.1} parent=1 // pred_region
      %110 = vsyncadd [#allocation4], 0
      %s112 = sshll.u32 [#allocation7], 4
      %s113 = int_to_ptr.vmem [resolvable:$true] %s112
      %s114 = sshll.u32 %s2, 4
      %s115 = int_to_ptr.hbm [resolvable:$true] %s114
      %117 = dma.vmem_to_hbm [thread:$0]  %s113, 16, %s115, [#allocation4]
    $region21: #{tpu_custom_call.1} parent=1 // pred_fallthru
      _
    // Predicated region
    $region22: #{tpu_custom_call.1} parent=1 // pred_check
      _
    $region23: #{tpu_custom_call.1} parent=1 // pred_check_branch
      %119 = sbr.rel (0) target = $region25
    $region24: #{tpu_custom_call.1} parent=1 // pred_region
      %121 = dma.done [#allocation4], 16
    $region25: #{tpu_custom_call.1} parent=1 // pred_fallthru
      _
    %122 = vsyncpa [#allocation3], 1
    %123 = vsyncpa [#allocation4], 1
    %124 = vsyncpa [#allocation5], 1

</llo_original>
